<compile_context>
chip_gen: v6e
topology: v6e:2x2x1
jax: 0.10.0
libtpu: 0.0.40
codegen_flags: <defaults>
</compile_context>

<pallas_src>
import functools
import math

import jax
import jax.numpy as jnp
import numpy as np
from jax import lax
from jax.experimental import pallas as pl
from jax.experimental.pallas import tpu as pltpu


def _round_up(v, m):
    return (v + m - 1) // m * m


def _vmem_budget_bytes():
    """~75% of physical per-core VMEM (headroom for Mosaic scratch / semaphores)."""
    cap = 64 * 1024 * 1024  # conservative default (v7x per-TC VMEM)
    try:
        info = pltpu.get_tpu_info()
        cap = int(getattr(info, "vmem_capacity_bytes", cap))
    except Exception:
        pass
    return (cap * 3) // 4


def _channel_gate(y, w_ref, num_ch):
    """3-tap zero-padded Conv1d over channels + sigmoid on a pooled (C, 1) f32."""
    c = y.shape[0]
    cp = _round_up(c, 8)
    if cp != c:  # sublane-align before the roll; padded rows are sliced off below
        y = jnp.concatenate([y, jnp.zeros((cp - c, 1), jnp.float32)], axis=0)
    c_idx = lax.broadcasted_iota(jnp.int32, (cp, 1), 0)
    # roll(y, 1)[c]      == y[c-1]  (wraps at c == 0,     masked)
    # roll(y, cp - 1)[c] == y[c+1]  (wraps at c == cp-1,  masked)
    y_prev = pltpu.roll(y, shift=1, axis=0)
    y_next = pltpu.roll(y, shift=cp - 1, axis=0)
    y_prev = jnp.where(c_idx == 0, 0.0, y_prev)
    y_next = jnp.where(c_idx == num_ch - 1, 0.0, y_next)
    gate = jax.nn.sigmoid(w_ref[0] * y_prev + w_ref[1] * y + w_ref[2] * y_next)
    if cp != c:
        gate = gate[:c, :]
    return gate  # (C, 1) f32


# --------------------------------------------------------------------------
# Path A: one-shot — per batch element the whole (C, HW) block lives in VMEM.
# --------------------------------------------------------------------------
def _eca_oneshot_kernel(w_ref, x_ref, o_ref, *, inv_hw, num_ch):
    """One batch element; x_ref / o_ref: (C, HW) full-array block (unpadded)."""
    xf = x_ref[...].astype(jnp.float32)                    # (C, HW)
    y = jnp.sum(xf, axis=-1, keepdims=True) * inv_hw       # (C, 1) global avg pool
    gate = _channel_gate(y, w_ref, num_ch)                 # (C, 1)
    o_ref[...] = (xf * gate).astype(o_ref.dtype)           # broadcast over lanes


def _eca_oneshot(x2, conv_w, vmem_budget):
    B, C, HW = x2.shape
    itemsize = jnp.dtype(x2.dtype).itemsize
    block_bytes = C * HW * itemsize
    vmem_limit = int(min(vmem_budget, max(4 * block_bytes + (2 << 20), 16 << 20)))
    kernel = functools.partial(_eca_oneshot_kernel, inv_hw=1.0 / HW, num_ch=C)
    return pl.pallas_call(
        kernel,
        out_shape=jax.ShapeDtypeStruct((B, C, HW), x2.dtype),
        grid_spec=pl.GridSpec(
            grid=(B,),
            in_specs=[
                pl.BlockSpec(memory_space=pltpu.MemorySpace.SMEM),     # conv weights
                pl.BlockSpec((None, C, HW), lambda b: (b, 0, 0)),      # per-batch tile
            ],
            out_specs=pl.BlockSpec((None, C, HW), lambda b: (b, 0, 0)),
        ),
        cost_estimate=pl.CostEstimate(
            flops=3 * B * C * HW,
            transcendentals=B * C,
            bytes_accessed=2 * B * C * HW * itemsize),
        compiler_params=pltpu.CompilerParams(
            dimension_semantics=("parallel",),          # batches across TCs (v7x)
            vmem_limit_bytes=vmem_limit),
    )(conv_w, x2)


# --------------------------------------------------------------------------
# Path B: two-pass HW-tiled fallback when the one-shot block exceeds VMEM.
# --------------------------------------------------------------------------
def _eca_pool_gate_kernel(w_ref, x_ref, g_ref, *, inv_hw, num_ch, hw, hw_tile):
    t = pl.program_id(1)

    @pl.when(t == 0)
    def _init():
        g_ref[...] = jnp.zeros_like(g_ref)

    x = x_ref[...].astype(jnp.float32)                     # (C, hw_tile)
    if hw % hw_tile != 0:                                  # mask ragged-tail reads
        lane = lax.broadcasted_iota(jnp.int32, x.shape, 1) + t * hw_tile
        x = jnp.where(lane < hw, x, 0.0)
    g_ref[...] += jnp.sum(x, axis=-1, keepdims=True)

    @pl.when(t == pl.num_programs(1) - 1)
    def _finalize():
        g_ref[...] = _channel_gate(g_ref[...] * inv_hw, w_ref, num_ch)


def _eca_scale_kernel(g_ref, x_ref, o_ref):
    o_ref[...] = (x_ref[...].astype(jnp.float32) * g_ref[...]).astype(o_ref.dtype)


def _eca_two_pass(x2, conv_w, vmem_budget, hw_tile=None):
    # TODO(synk): fuse the two passes into one pallas_call with a carried gate
    # if the extra 0.5x HBM read ever dominates; two simple calls kept for now.
    B, C, HW = x2.shape
    itemsize = jnp.dtype(x2.dtype).itemsize
    if hw_tile is None:
        budget = max(vmem_budget - (4 << 20), 4 << 20)
        hw_tile = max(128, (budget // (4 * C * itemsize)) // 128 * 128)
    hw_tile = int(min(hw_tile, _round_up(HW, 128)))
    num_tiles = -(-HW // hw_tile)
    tile_bytes = C * hw_tile * itemsize
    vmem_limit = int(min(vmem_budget, max(4 * tile_bytes + (4 << 20), 16 << 20)))

    pool_kernel = functools.partial(
        _eca_pool_gate_kernel, inv_hw=1.0 / HW, num_ch=C, hw=HW, hw_tile=hw_tile)
    gate = pl.pallas_call(
        pool_kernel,
        out_shape=jax.ShapeDtypeStruct((B, C, 1), jnp.float32),
        grid_spec=pl.GridSpec(
            grid=(B, num_tiles),
            in_specs=[
                pl.BlockSpec(memory_space=pltpu.MemorySpace.SMEM),
                pl.BlockSpec((None, C, hw_tile), lambda b, t: (b, 0, t)),
            ],
            out_specs=pl.BlockSpec((None, C, 1), lambda b, t: (b, 0, 0)),
        ),
        cost_estimate=pl.CostEstimate(
            flops=2 * B * C * HW,
            transcendentals=B * C,
            bytes_accessed=B * C * HW * itemsize + B * C * 4),
        compiler_params=pltpu.CompilerParams(
            dimension_semantics=("parallel", "arbitrary"),
            vmem_limit_bytes=vmem_limit),
    )(conv_w, x2)

    return pl.pallas_call(
        _eca_scale_kernel,
        out_shape=jax.ShapeDtypeStruct((B, C, HW), x2.dtype),
        grid_spec=pl.GridSpec(
            grid=(B, num_tiles),
            in_specs=[
                pl.BlockSpec((None, C, 1), lambda b, t: (b, 0, 0)),
                pl.BlockSpec((None, C, hw_tile), lambda b, t: (b, 0, t)),
            ],
            out_specs=pl.BlockSpec((None, C, hw_tile), lambda b, t: (b, 0, t)),
        ),
        cost_estimate=pl.CostEstimate(
            flops=B * C * HW,
            transcendentals=0,
            bytes_accessed=2 * B * C * HW * itemsize + B * C * 4),
        compiler_params=pltpu.CompilerParams(
            dimension_semantics=("parallel", "parallel"),  # HW tiles across TCs too
            vmem_limit_bytes=vmem_limit),
    )(gate, x2)


# --------------------------------------------------------------------------
# Public wrapper
# --------------------------------------------------------------------------
def eca_forward(x, conv_w, *, force_two_pass=False, hw_tile=None):
    """x: (B, C, H, W) NCHW; conv_w: Conv1d(1,1,3,bias=False) weight (3 elems)."""
    B, C, H, W = x.shape
    HW = H * W
    x2 = x.reshape(B, C, HW)                        # metadata-only, no HBM copy
    w = conv_w.reshape(-1).astype(jnp.float32)      # accepts (3,) or (1, 1, 3)

    itemsize = jnp.dtype(x.dtype).itemsize
    vmem_budget = _vmem_budget_bytes()
    oneshot_need = 4 * C * HW * itemsize + (2 << 20)  # double-buffered in + out

    if force_two_pass or oneshot_need > vmem_budget:
        out2 = _eca_two_pass(x2, w, vmem_budget, hw_tile=hw_tile)
    else:
        # TODO(synk): for B == 1 on v7x (2 TCs) the one-shot path only uses one
        # core; route such shapes through the HW-tiled path if batch-1 latency
        # matters.
        out2 = _eca_oneshot(x2, w, vmem_budget)
    return out2.reshape(B, C, H, W)


def eca_reference(x, conv_w):
    """Pure-JAX reference mirroring the PyTorch module (f32 math)."""
    w = conv_w.reshape(-1).astype(jnp.float32)
    y = jnp.mean(x.astype(jnp.float32), axis=(2, 3))          # (B, C)
    yp = jnp.pad(y, ((0, 0), (1, 1)))                         # zero pad, padding=1
    y2 = w[0] * yp[:, :-2] + w[1] * yp[:, 1:-1] + w[2] * yp[:, 2:]
    s = jax.nn.sigmoid(y2)[:, :, None, None]
    return x.astype(jnp.float32) * s


if __name__ == "__main__":
    key = jax.random.PRNGKey(0)
    kx, kw, kx2, kx3 = jax.random.split(key, 4)

    # Conv1d(1, 1, kernel_size=3, bias=False) weight, kaiming-uniform (fan_in=3).
    bound = 1.0 / math.sqrt(3.0)
    conv_w = jax.random.uniform(kw, (3,), minval=-bound, maxval=bound,
                                dtype=jnp.float32)

    # 1) Aligned f32 shape, one-shot path.
    x = jax.random.normal(kx, (2, 16, 16, 16), dtype=jnp.float32)
    out = jax.block_until_ready(eca_forward(x, conv_w))
    ref = eca_reference(x, conv_w)
    assert out.shape == x.shape and out.dtype == x.dtype
    assert np.allclose(np.asarray(out), np.asarray(ref), atol=1e-5, rtol=1e-5)

    # 2) Unaligned C / HW (C % 8 != 0, HW % 128 != 0), no host-side padding.
    xu = jax.random.normal(kx2, (2, 20, 7, 7), dtype=jnp.float32)
    outu = jax.block_until_ready(eca_forward(xu, conv_w))
    refu = eca_reference(xu, conv_w)
    assert np.allclose(np.asarray(outu), np.asarray(refu), atol=1e-5, rtol=1e-5)

    # 3) Forced two-pass (HW-tiled) fallback with a ragged last tile.
    xt = jax.random.normal(kx3, (2, 16, 10, 20), dtype=jnp.float32)
    outt = jax.block_until_ready(
        eca_forward(xt, conv_w, force_two_pass=True, hw_tile=128))
    reft = eca_reference(xt, conv_w)
    assert np.allclose(np.asarray(outt), np.asarray(reft), atol=1e-5, rtol=1e-5)

    # 4) bf16 I/O (gate math stays f32 inside the kernel).
    xb = x.astype(jnp.bfloat16)
    outb = jax.block_until_ready(eca_forward(xb, conv_w))
    refb = eca_reference(xb, conv_w)
    assert outb.dtype == jnp.bfloat16
    assert np.allclose(np.asarray(outb, dtype=np.float32), np.asarray(refb),
                       atol=3e-2, rtol=3e-2)

    print("KERNEL_OK")
</pallas_src>

<mosaic_0001>
module attributes {stable_mosaic.version = 11 : i64} {
  func.func @_eca_oneshot_kernel(%arg0: i32, %arg1: memref<3xf32, #tpu.memory_space<smem>>, %arg2: memref<1x16x256xf32, #tpu.memory_space<vmem>>, %arg3: memref<1x16x256xf32, #tpu.memory_space<vmem>>) attributes {dimension_semantics = [#tpu.dimension_semantics<parallel>], iteration_bounds = array<i64: 2>, scalar_prefetch = 0 : i64, scratch_operands = 0 : i64, tpu.core_type = #tpu.core_type<tc>, window_params = [{transform_indices = @transform_0, window_bounds = array<i64: 3>}, {transform_indices = @transform_1, window_bounds = array<i64: 1, 16, 256>}, {transform_indices = @transform_2, window_bounds = array<i64: 1, 16, 256>}]} {
    %c0 = arith.constant 0 : index
    %c0_0 = arith.constant 0 : index
    %c0_1 = arith.constant 0 : index
    %0 = vector.load %arg2[%c0, %c0_0, %c0_1] : memref<1x16x256xf32, #tpu.memory_space<vmem>>, vector<1x16x256xf32>
    %1 = vector.shape_cast %0 : vector<1x16x256xf32> to vector<16x256xf32>
    %cst = arith.constant dense<0.000000e+00> : vector<16xf32>
    %2 = vector.multi_reduction <add>, %1, %cst [1] : vector<16x256xf32> to vector<16xf32>
    %3 = vector.shape_cast %2 : vector<16xf32> to vector<16x1xf32>
    %cst_2 = arith.constant 3.906250e-03 : f32
    %4 = vector.broadcast %cst_2 : f32 to vector<16x1xf32>
    %5 = arith.mulf %3, %4 : vector<16x1xf32>
    %6 = tpu.iota {dimensions = array<i32: 0>} : vector<16x1xi32>
    %c1_i32 = arith.constant 1 : i32
    %7 = tpu.dynamic_rotate %5 by %c1_i32 dim 0 : vector<16x1xf32>, i32 -> vector<16x1xf32>
    %c15_i32 = arith.constant 15 : i32
    %8 = tpu.dynamic_rotate %5 by %c15_i32 dim 0 : vector<16x1xf32>, i32 -> vector<16x1xf32>
    %c0_i32 = arith.constant 0 : i32
    %9 = vector.broadcast %c0_i32 : i32 to vector<16x1xi32>
    %10 = arith.cmpi eq, %6, %9 : vector<16x1xi32>
    %cst_3 = arith.constant 0.000000e+00 : f32
    %11 = vector.broadcast %cst_3 : f32 to vector<16x1xf32>
    %12 = arith.select %10, %11, %7 : vector<16x1xi1>, vector<16x1xf32>
    %c15_i32_4 = arith.constant 15 : i32
    %13 = vector.broadcast %c15_i32_4 : i32 to vector<16x1xi32>
    %14 = arith.cmpi eq, %6, %13 : vector<16x1xi32>
    %cst_5 = arith.constant 0.000000e+00 : f32
    %15 = vector.broadcast %cst_5 : f32 to vector<16x1xf32>
    %16 = arith.select %14, %15, %8 : vector<16x1xi1>, vector<16x1xf32>
    %c0_6 = arith.constant 0 : index
    %17 = memref.load %arg1[%c0_6] : memref<3xf32, #tpu.memory_space<smem>>
    %18 = vector.broadcast %17 : f32 to vector<16x1xf32>
    %19 = arith.mulf %18, %12 : vector<16x1xf32>
    %c1 = arith.constant 1 : index
    %20 = memref.load %arg1[%c1] : memref<3xf32, #tpu.memory_space<smem>>
    %21 = vector.broadcast %20 : f32 to vector<16x1xf32>
    %22 = arith.mulf %21, %5 : vector<16x1xf32>
    %23 = arith.addf %19, %22 : vector<16x1xf32>
    %c2 = arith.constant 2 : index
    %24 = memref.load %arg1[%c2] : memref<3xf32, #tpu.memory_space<smem>>
    %25 = vector.broadcast %24 : f32 to vector<16x1xf32>
    %26 = arith.mulf %25, %16 : vector<16x1xf32>
    %27 = arith.addf %23, %26 : vector<16x1xf32>
    %28 = arith.negf %27 : vector<16x1xf32>
    %29 = math.exp %28 : vector<16x1xf32>
    %cst_7 = arith.constant 1.000000e+00 : f32
    %30 = vector.broadcast %cst_7 : f32 to vector<16x1xf32>
    %31 = arith.addf %30, %29 : vector<16x1xf32>
    %32 = arith.divf %30, %31 : vector<16x1xf32>
    %33 = vector.broadcast %32 : vector<16x1xf32> to vector<16x256xf32>
    %34 = arith.mulf %1, %33 : vector<16x256xf32>
    %c0_8 = arith.constant 0 : index
    %c0_9 = arith.constant 0 : index
    %c0_10 = arith.constant 0 : index
    %35 = vector.load %arg3[%c0_8, %c0_9, %c0_10] : memref<1x16x256xf32, #tpu.memory_space<vmem>>, vector<1x16x256xf32>
    %36 = vector.shape_cast %35 : vector<1x16x256xf32> to vector<16x256xf32>
    %37 = vector.shape_cast %34 : vector<16x256xf32> to vector<1x16x256xf32>
    tpu.vector_store %arg3[%c0_8, %c0_9, %c0_10], %37 {strides = array<i32>} : memref<1x16x256xf32, #tpu.memory_space<vmem>>, vector<1x16x256xf32>,
    return
  }
  func.func @transform_0(%arg0: i32) -> i32 {
    %c0_i32 = arith.constant 0 : i32
    %c0_i32_0 = arith.constant 0 : i32
    return %c0_i32 : i32
  }
  func.func @transform_1(%arg0: i32) -> (i32, i32, i32) {
    %c0_i32 = arith.constant 0 : i32
    %c0_i32_0 = arith.constant 0 : i32
    %c0_i32_1 = arith.constant 0 : i32
    return %arg0, %c0_i32, %c0_i32_0 : i32, i32, i32
  }
  func.func @transform_2(%arg0: i32) -> (i32, i32, i32) {
    %c0_i32 = arith.constant 0 : i32
    %c0_i32_0 = arith.constant 0 : i32
    %c0_i32_1 = arith.constant 0 : i32
    return %arg0, %c0_i32, %c0_i32_0 : i32, i32, i32
  }
}

</mosaic_0001>

<llo_original>
// kernel: tpu_custom_call.1
$region0: #{tpu_custom_call.1}
  #allocation0 [shape = 'u32[]', space=smem, size = 0x4, offset = 0x4, fixed_abs, tag = 'smem constant byte address 0x4 - core index']
  #allocation1 [shape = 'u32[144,128]{1,0:T(1,128)}', space=vmem, size = 0x12000, scoped, tag = 'internal scratch']
  %s0 = inlined_call_operand.hbm [shape: f32[3], index: 0, kind: input, shape index: {}]
  %s1 = inlined_call_operand.hbm [shape: f32[2,16,256], index: 1, kind: input, shape index: {}]
  %s2 = inlined_call_operand.hbm [shape: f32[2,16,256], index: 2, kind: output, shape index: {}]
  %s3 = sld [smem:[#allocation0]]
  $region49: #{tpu_custom_call.1} parent=0
    _
  %s5 = ssub.s32 1, %s3
  %s6 = scalar_select 0, %s5, %s3
  $region1: #{tpu_custom_call.1} parent=0
    #allocation2 [shape = 'u8[512]{0}', space=smem, size = 0x200, scoped, tag = 'input window, operand 0, single buffered']
    #allocation3 [shape = 's32[2]{0}', space=sflag, size = 0x8, scoped, tag = 'scoped memory for tpu_custom_call.1']
    #allocation4 [shape = 's32[2]{0}', space=sflag, size = 0x8, scoped, tag = 'scoped memory for tpu_custom_call.1']
    #allocation5 [shape = 's32[2]{0}', space=sflag, size = 0x8, scoped, tag = 'scoped memory for tpu_custom_call.1']
    #allocation6 [shape = 'u8[32768]{0}', space=vmem, size = 0x8000, scoped, tag = 'input window, operand 1']
    #allocation7 [shape = 'u8[32768]{0}', space=vmem, size = 0x8000, scoped, tag = 'output window, operand 0']
    %7 = vsyncpa [#allocation5], 0
    %8 = vsyncpa [#allocation3], 0
    %s9 = scalar_lea.sflag [#allocation3], 1
    %10 = vsyncpa %s9, 0
    %11 = vsyncpa [#allocation4], 0
    %s12 = scalar_lea.sflag [#allocation4], 1
    %13 = vsyncpa %s12, 0
    loop: start=0, step=1, limit=4
    $region2: #{tpu_custom_call.1} parent=1 // loop_pre_header
      _
    $region3: #{tpu_custom_call.1} parent=1 // loop_header
      %s15 = sphi 0, %s19
      %p16 = scmp.ge.s32.totalorder %s15, 4
      %s23 = sphi 0, %s23
      %s25 = sphi 0, %s23
      %s26 = sphi 0, %s25
      %s40 = sphi 0, %s26
      %s46 = sphi 0, %s48
      %s49 = sphi 0, %s46
      %s50 = sphi 0, %s49
      %s66 = sphi 0, %s50
      %s72 = sphi 0, %s74
      %s75 = sphi 0, %s72
      %s76 = sphi 0, %s75
      %s92 = sphi 0, %s76
    $region4: #{tpu_custom_call.1} parent=1 // loop_header_branch
      %18 = sbr.rel (%p16) target = $region8
    $region5: #{tpu_custom_call.1} parent=1 // loop_body
      %s20 = ssub.s32 %s15, 1
      %s21 = ssub.s32 %s15, 2
      %s22 = sadd.s32 %s15, 1
      %s24 = sadd.s32 %s23, 1
      %p27 = scmp.eq.s32.totalorder %s15, 1
      %p28 = scmp.ne.s32.totalorder %s23, %s25
      %p29 = scmp.eq.s32.totalorder %s15, 0
      %p30 = por %p28, %p29
      %p31 = scmp.ne.s32.totalorder %s23, %s25
      %p32 = scmp.eq.s32.totalorder %s20, 1
      %p33 = por %p31, %p32
      %p34 = scmp.ne.s32.totalorder %s25, %s26
      %p35 = scmp.eq.s32.totalorder %s20, 0
      %p36 = por %p34, %p35
      %p37 = scmp.ne.s32.totalorder %s25, %s26
      %p38 = scmp.eq.s32.totalorder %s21, 1
      %p39 = por %p37, %p38
      %p41 = scmp.ne.s32.totalorder %s26, %s40
      %p42 = scmp.eq.s32.totalorder %s21, 0
      %p43 = por %p41, %p42
      %s44 = ssub.s32 %s15, %s22
      %p45 = scmp.eq.s32.totalorder %s44, 0
      %s47 = sadd.s32 %s46, 1
      %s48 = scalar_select %p45, %s46, %s47
      %p51 = pneg %p45
      %p52 = scmp.eq.s32.totalorder %s15, 1
      %p53 = por %p51, %p52
      %p54 = scmp.ne.s32.totalorder %s46, %s49
      %p55 = scmp.eq.s32.totalorder %s15, 0
      %p56 = por %p54, %p55
      %p57 = scmp.ne.s32.totalorder %s46, %s49
      %p58 = scmp.eq.s32.totalorder %s20, 1
      %p59 = por %p57, %p58
      %p60 = scmp.ne.s32.totalorder %s49, %s50
      %p61 = scmp.eq.s32.totalorder %s20, 0
      %p62 = por %p60, %p61
      %p63 = scmp.ne.s32.totalorder %s49, %s50
      %p64 = scmp.eq.s32.totalorder %s21, 1
      %p65 = por %p63, %p64
      %p67 = scmp.ne.s32.totalorder %s50, %s66
      %p68 = scmp.eq.s32.totalorder %s21, 0
      %p69 = por %p67, %p68
      %s70 = ssub.s32 %s15, %s22
      %p71 = scmp.eq.s32.totalorder %s70, 0
      %s73 = sadd.s32 %s72, 1
      %s74 = scalar_select %p71, %s72, %s73
      %p77 = pneg %p71
      %p78 = scmp.eq.s32.totalorder %s15, 1
      %p79 = por %p77, %p78
      %p80 = scmp.ne.s32.totalorder %s72, %s75
      %p81 = scmp.eq.s32.totalorder %s15, 0
      %p82 = por %p80, %p81
      %p83 = scmp.ne.s32.totalorder %s72, %s75
      %p84 = scmp.eq.s32.totalorder %s20, 1
      %p85 = por %p83, %p84
      %p86 = scmp.ne.s32.totalorder %s75, %s76
      %p87 = scmp.eq.s32.totalorder %s20, 0
      %p88 = por %p86, %p87
      %p89 = scmp.ne.s32.totalorder %s75, %s76
      %p90 = scmp.eq.s32.totalorder %s21, 1
      %p91 = por %p89, %p90
      %p93 = scmp.ne.s32.totalorder %s76, %s92
      %p94 = scmp.eq.s32.totalorder %s21, 0
      %p95 = por %p93, %p94
      %p96 = scmp.le.s32.totalorder 1, %s15
      %p97 = scmp.lt.s32.totalorder %s15, 3
      %p98 = pnand %p96, %p97
      %p99 = pneg %p98
      // Predicated region
      $region9: #{tpu_custom_call.1} parent=5 // pred_check
        _
      $region10: #{tpu_custom_call.1} parent=5 // pred_check_branch
        %101 = sbr.rel (%p98) target = $region12
      $region11: #{tpu_custom_call.1} parent=5 // pred_region
        %s102 = ssub.s32 %s15, 1
        // Predicated region
        $region13: #{tpu_custom_call.1} parent=11 // pred_check
          %p103 = pneg %p36
        $region14: #{tpu_custom_call.1} parent=11 // pred_check_branch
          %105 = sbr.rel (%p103) target = $region16
        $region15: #{tpu_custom_call.1} parent=11 // pred_region
          %s107 = ssub.s32 16, 16
          %108 = vsyncadd [#allocation5], %s107
          %111 = dma.hbm_to_smem %s0, 16, [#allocation2], [#allocation5]
        $region16: #{tpu_custom_call.1} parent=11 // pred_fallthru
          _
      $region12: #{tpu_custom_call.1} parent=5 // pred_fallthru
        _
      %p112 = scmp.lt.s32.totalorder %s15, 2
      // Predicated region
      $region17: #{tpu_custom_call.1} parent=5 // pred_check
        %p113 = pneg %p112
      $region18: #{tpu_custom_call.1} parent=5 // pred_check_branch
        %115 = sbr.rel (%p113) target = $region20
      $region19: #{tpu_custom_call.1} parent=5 // pred_region
        // Predicated region
        $region21: #{tpu_custom_call.1} parent=19 // pred_check
          %p116 = pneg %p56
        $region22: #{tpu_custom_call.1} parent=19 // pred_check_branch
          %118 = sbr.rel (%p116) target = $region24
        $region23: #{tpu_custom_call.1} parent=19 // pred_region
          %s119 = sand.u32 %s46, 1
          %s120 = scalar_lea.sflag [#allocation3], %s119
          %s121 = sand.u32 %s46, 1
          %s122 = smul.addr %s121, 32
          %s123 = scalar_lea.vmem [#allocation6], %s122
          %s125 = ssub.s32 512, 512
          %126 = vsyncadd %s120, %s125
          %s127 = smul.addr %s15, 4
          %s128 = smul.addr %s127, 128
          %s129 = scalar_lea.hbm %s1, %s128
          %s130 = sshll.u32 %s123, 4
          %s131 = int_to_ptr.vmem [resolvable:$true] %s130
          %136 = dma.hbm_to_vmem [thread:$0]  %s129, 512, %s131, %s120, 256, 256, 16
        $region24: #{tpu_custom_call.1} parent=19 // pred_fallthru
          _
      $region20: #{tpu_custom_call.1} parent=5 // pred_fallthru
        _
      %p137 = scmp.le.s32.totalorder 1, %s15
      %p138 = scmp.lt.s32.totalorder %s15, 3
      %p139 = pnand %p137, %p138
      %p140 = pneg %p139
      // Predicated region
      $region25: #{tpu_custom_call.1} parent=5 // pred_check
        _
      $region26: #{tpu_custom_call.1} parent=5 // pred_check_branch
        %142 = sbr.rel (%p139) target = $region28
      $region27: #{tpu_custom_call.1} parent=5 // pred_region
        %s143 = ssub.s32 %s15, 1
        // Predicated region
        $region29: #{tpu_custom_call.1} parent=27 // pred_check
          %p144 = pneg %p36
        $region30: #{tpu_custom_call.1} parent=27 // pred_check_branch
          %146 = sbr.rel (%p144) target = $region32
        $region31: #{tpu_custom_call.1} parent=27 // pred_region
          %147 = dma.done [#allocation5], 16
        $region32: #{tpu_custom_call.1} parent=27 // pred_fallthru
          _
        %s148 = sand.u32 %s49, 1
        %s149 = scalar_lea.sflag [#allocation3], %s148
        %s150 = sand.u32 %s49, 1
        %s151 = smul.addr %s150, 32
        %s152 = scalar_lea.vmem [#allocation6], %s151
        // Predicated region
        $region33: #{tpu_custom_call.1} parent=27 // pred_check
          %p153 = pneg %p62
        $region34: #{tpu_custom_call.1} parent=27 // pred_check_branch
          %155 = sbr.rel (%p153) target = $region36
        $region35: #{tpu_custom_call.1} parent=27 // pred_region
          %156 = dma.done %s149, 512
        $region36: #{tpu_custom_call.1} parent=27 // pred_fallthru
          _
        %157 = sfence
        %p158 = pneg %p36
        %p159 = pneg %p33
        %s160 = sand.u32 %s49, 1
        %s161 = scalar_lea.sflag [#allocation3], %s160
        %s162 = sand.u32 %s49, 1
        %s163 = smul.addr %s162, 32
        %s164 = scalar_lea.vmem [#allocation6], %s163
        %p165 = pneg %p62
        %p166 = pneg %p59
        %p167 = pneg %p88
        %p168 = pneg %p85
        %s169 = sand.u32 %s75, 1
        %s170 = scalar_lea.sflag [#allocation4], %s169
        %s171 = sand.u32 %s75, 1
        %s172 = smul.addr %s171, 32
        %s173 = scalar_lea.vmem [#allocation7], %s172
        %v174 = vld [vmem:[%s152] sm:$0xff]
        %v175 = vld [vmem:[%s152 + $0x8] sm:$0xff]
        %v176 = vld [vmem:[%s152 + $0x10] sm:$0xff]
        %v177 = vld [vmem:[%s152 + $0x18] sm:$0xff]
        %v178 = vadd.f32 %v174, %v175
        %179 = vadd.xlane.f32.xlu0 %v178
        %v180 = vpop.xlane.xlu0 %179
        %v181 = vadd.f32 %v176, %v177
        %182 = vadd.xlane.f32.xlu0 %v181
        %v183 = vpop.xlane.xlu0 %182
        %v184 = vmul.f32 %v180, 0.00390625
        %v185 = vmul.f32 %v183, 0.00390625
        %v186 = vlaneseq
        %v187 = vshrl.u32 %v186, 7
        %v188 = vadd.s32 %v187, 8
        %v189 = vrot.slane %v184, 7
        %v190 = vrot.slane %v185, 7
        %vm191 = vcmp.lt.s32.totalorder %v187, 1
        %v192 = vsel %vm191, %v189, %v190
        %v193 = vsel %vm191, %v190, %v189
        %v194 = vrot.slane %v184, 1
        %v195 = vrot.slane %v185, 1
        %vm196 = vcmp.lt.s32.totalorder %v187, 7
        %v197 = vsel %vm196, %v194, %v195
        %v198 = vsel %vm196, %v195, %v194
        %vm199 = vcmp.eq.s32.totalorder %v187, 0
        %vm200 = vcmp.eq.s32.totalorder %v188, 0
        %v201 = vsel %vm199, 0.0, %v193
        %v202 = vsel %vm200, 0.0, %v192
        %vm203 = vcmp.eq.s32.totalorder %v187, 15
        %vm204 = vcmp.eq.s32.totalorder %v188, 15
        %v205 = vsel %vm203, 0.0, %v197
        %v206 = vsel %vm204, 0.0, %v198
        %s207 = sld [smem:[#allocation2]]
        %v208 = vstv %s207
        %v209 = vmul.f32 %v208, %v201
        %v210 = vmul.f32 %v208, %v202
        %s211 = sld [smem:[#allocation2 + $0x1]]
        %v212 = vstv %s211
        %v213 = vmul.f32 %v212, %v184
        %v214 = vmul.f32 %v212, %v185
        %v215 = vadd.f32 %v209, %v213
        %v216 = vadd.f32 %v210, %v214
        %s217 = sld [smem:[#allocation2 + $0x2]]
        %v218 = vstv %s217
        %v219 = vmul.f32 %v218, %v205
        %v220 = vmul.f32 %v218, %v206
        %v221 = vadd.f32 %v215, %v219
        %v222 = vadd.f32 %v216, %v220
        %v223 = vxor.u32 %v221, 2147483648
        %v224 = vxor.u32 %v222, 2147483648
        %v225 = vmul.f32 %v223, 1.442695
        %v226 = vpow.pop %v225
        %v227 = vmul.f32 %v224, 1.442695
        %v228 = vpow.pop %v227
        %v229 = vadd.f32 %v226, 1.0
        %v230 = vadd.f32 %v228, 1.0
        %v231 = vrcp.pop %v229
        %v232 = vmul.f32 1.0, %v231
        %v233 = vrcp.pop %v230
        %v234 = vmul.f32 1.0, %v233
        %236 = vset.pattern.permute.xlu0 0
        %237 = vperm.xlu0 %236, %v232
        %v238 = vpop.permute.xlu0 %237
        %241 = vset.pattern.permute.xlu0 0
        %242 = vperm.xlu0 %241, %v234
        %v243 = vpop.permute.xlu0 %242
        %v245 = vmul.f32 %v174, %v238
        %v246 = vmul.f32 %v175, %v238
        %v247 = vmul.f32 %v176, %v243
        %v248 = vmul.f32 %v177, %v243
        %249 = vst [vmem:[%s173] sm:$0xff] %v245
        %250 = vst [vmem:[%s173 + $0x8] sm:$0xff] %v246
        %251 = vst [vmem:[%s173 + $0x10] sm:$0xff] %v247
        %252 = vst [vmem:[%s173 + $0x18] sm:$0xff] %v248
        %s253 = sand.u32 %s75, 1
        %s254 = scalar_lea.sflag [#allocation4], %s253
        %s255 = sand.u32 %s75, 1
        %s256 = smul.addr %s255, 32
        %s257 = scalar_lea.vmem [#allocation7], %s256
        // Predicated region
        $region37: #{tpu_custom_call.1} parent=27 // pred_check
          %p258 = pneg %p85
        $region38: #{tpu_custom_call.1} parent=27 // pred_check_branch
          %260 = sbr.rel (%p258) target = $region40
        $region39: #{tpu_custom_call.1} parent=27 // pred_region
          %s262 = ssub.s32 512, 512
          %263 = vsyncadd %s254, %s262
          %s264 = smul.addr %s20, 4
          %s265 = smul.addr %s264, 128
          %s266 = scalar_lea.hbm %s2, %s265
          %s267 = sshll.u32 %s257, 4
          %s268 = int_to_ptr.vmem [resolvable:$true] %s267
          %273 = dma.vmem_to_hbm [thread:$0]  %s268, 512, %s266, %s254, 256, 256, 16
        $region40: #{tpu_custom_call.1} parent=27 // pred_fallthru
          _
      $region28: #{tpu_custom_call.1} parent=5 // pred_fallthru
        _
      %p274 = scmp.le.s32.totalorder 2, %s15
      // Predicated region
      $region41: #{tpu_custom_call.1} parent=5 // pred_check
        %p275 = pneg %p274
      $region42: #{tpu_custom_call.1} parent=5 // pred_check_branch
        %277 = sbr.rel (%p275) target = $region44
      $region43: #{tpu_custom_call.1} parent=5 // pred_region
        %s278 = ssub.s32 %s15, 2
        // Predicated region
        $region45: #{tpu_custom_call.1} parent=43 // pred_check
          %p279 = pneg %p91
        $region46: #{tpu_custom_call.1} parent=43 // pred_check_branch
          %281 = sbr.rel (%p279) target = $region48
        $region47: #{tpu_custom_call.1} parent=43 // pred_region
          %s282 = sand.u32 %s76, 1
          %s283 = scalar_lea.sflag [#allocation4], %s282
          %s284 = sand.u32 %s76, 1
          %s285 = smul.addr %s284, 32
          %s286 = scalar_lea.vmem [#allocation7], %s285
          %287 = dma.done %s283, 512
        $region48: #{tpu_custom_call.1} parent=43 // pred_fallthru
          _
      $region44: #{tpu_custom_call.1} parent=5 // pred_fallthru
        _
    $region6: #{tpu_custom_call.1} parent=1 // loop_footer
      %s19 = sadd.s32 1, %s15
    $region7: #{tpu_custom_call.1} parent=1 // loop_footer_branch
      %14 = sbr.rel target = $region3
    $region8: #{tpu_custom_call.1} parent=1 // loop_exit
      _
    %288 = vsyncpa [#allocation3], 1
    %s289 = scalar_lea.sflag [#allocation3], 1
    %290 = vsyncpa %s289, 1
    %291 = vsyncpa [#allocation4], 1
    %s292 = scalar_lea.sflag [#allocation4], 1
    %293 = vsyncpa %s292, 1
    %294 = vsyncpa [#allocation5], 1
    %s295 = scalar_lea.sflag [#allocation5], 1
    %296 = vsyncpa %s295, 1

</llo_original>
